<compile_context>
chip_gen: v5e
topology: v5e:2x2
jax: 0.10.0
libtpu: 0.0.40
codegen_flags: <defaults>
</compile_context>

<pallas_src>
import math
import numpy as np
import jax
import jax.numpy as jnp
from jax.experimental import pallas as pl
from jax.experimental.pallas import tpu as pltpu

LANES = 128
ROW_ALIGN = 16          # bf16 packed-sublane granule: keep every slab slice tile-aligned


def _round_up(n, m):
    return (n + m - 1) // m * m


# --------------------------- parameter packing ----------------------------
def make_layout(obs_spec, hidden_sizes, act_dim):
    """Row offsets of every weight / bias inside the packed (rows, 128) slab.

    obs_spec: ordered tuple of (key, feature_dim) for every non-image obs key.
    The canonical key order lives in the layout so the wrapper and the
    reference always feed features in the order the weights were packed for.
    """
    part_keys = tuple(k for k, _ in obs_spec)
    part_dims = tuple(d for _, d in obs_spec)
    obs_dim = sum(part_dims)
    sizes = (obs_dim,) + tuple(hidden_sizes) + (act_dim,)
    assert len(sizes) >= 2
    assert all(s <= LANES for s in sizes[1:]), "hidden/act widths must fit in 128 lanes"

    ctx_pad = _round_up(obs_dim, ROW_ALIGN)
    # Padded fan-in rows per weight block: layer 0 contracts over the padded
    # context width; deeper layers contract over the full 128 lanes of h
    # (padded lanes are zero, so zero weight rows make this exact).
    w_rows = (ctx_pad,) + (LANES,) * (len(sizes) - 2)

    rows, w_off, b_off = 0, [], []
    for r in w_rows:
        w_off.append(rows)
        rows += r                      # weight block (already ROW_ALIGN-aligned)
        b_off.append(rows)
        rows += ROW_ALIGN              # bias lives in row 0 of its own aligned block
    return dict(sizes=sizes, ctx_pad=ctx_pad, w_rows=tuple(w_rows),
                w_off=tuple(w_off), b_off=tuple(b_off), rows=rows,
                part_keys=part_keys, part_dims=part_dims)


def make_params(key, sizes):
    """torch.nn.Linear-style init; weight stored as (fan_in, fan_out).

    Parameters are quantized to bfloat16 (the model's storage dtype) so the
    kernel slab and the pure-JAX reference share exactly the same values.
    """
    params = []
    keys = jax.random.split(key, len(sizes) - 1)
    for k, fan_in, fan_out in zip(keys, sizes[:-1], sizes[1:]):
        kw, kb = jax.random.split(k)
        bound = 1.0 / math.sqrt(fan_in)
        w = jax.random.uniform(kw, (fan_in, fan_out), jnp.float32, -bound, bound)
        b = jax.random.uniform(kb, (fan_out,), jnp.float32, -bound, bound)
        params.append((w.astype(jnp.bfloat16), b.astype(jnp.bfloat16)))
    return params


def pack_params(params, layout):
    """Pack all (w, b) pairs into a single (rows, 128) bf16 slab (zero padded)."""
    slab = np.zeros((layout["rows"], LANES), np.float32)
    for (w, b), wo, bo in zip(params, layout["w_off"], layout["b_off"]):
        fan_in, fan_out = w.shape
        slab[wo:wo + fan_in, :fan_out] = np.asarray(w, np.float32)
        slab[bo, :fan_out] = np.asarray(b, np.float32)
    return jnp.asarray(slab, jnp.bfloat16)


# ------------------------------ Pallas kernel ------------------------------
def _make_actor_kernel(layout, act_limit):
    w_off = layout["w_off"]
    w_rows = layout["w_rows"]
    b_off = layout["b_off"]
    n_layers = len(layout["sizes"]) - 1

    def kernel(x_ref, p_ref, out_ref):
        f32 = jnp.float32
        bf16 = jnp.bfloat16
        h = x_ref[...]                                             # (tile, ctx_pad) f32
        for j in range(n_layers):
            # Full 128-lane, 16-row-aligned slab slices; zero columns/rows are free.
            w = p_ref[w_off[j]:w_off[j] + w_rows[j], :]            # (rows_j, 128) bf16
            b = p_ref[b_off[j]:b_off[j] + 1, :].astype(f32)        # (1, 128) f32
            h = jnp.dot(h.astype(bf16), w, preferred_element_type=f32) + b
            if j < n_layers - 1:
                h = jnp.maximum(h, 0.0)                            # ReLU (f32 VPU)
        # Sigmoid output activation; act_limit folded into the EUP reciprocal multiply.
        out_ref[...] = act_limit * pl.reciprocal(1.0 + jnp.exp(-h), approx=True)

    return kernel


# ------------------------------- wrapper ------------------------------------
def mlp_actor_forward(obs, slab, layout, act_limit, *, block_rows=256):
    """obs: dict of (B, d_i) arrays; non-image keys are read in layout order."""
    # Canonical key order from the layout (NOT dict iteration order).
    parts = [jnp.asarray(obs[k], jnp.float32) for k in layout["part_keys"]]
    x = jnp.concatenate(parts, axis=1)                             # (B, obs_dim)
    B = x.shape[0]
    ctx_pad = layout["ctx_pad"]
    act_dim = layout["sizes"][-1]

    # Lane-pad the context and row-pad the batch to a clean tile grid.
    if x.shape[1] != ctx_pad:
        x = jnp.pad(x, ((0, 0), (0, ctx_pad - x.shape[1])))
    tile = min(block_rows, _round_up(B, 8))
    B_pad = _round_up(B, tile)
    if B_pad != B:
        x = jnp.pad(x, ((0, B_pad - B), (0, 0)))
    grid = (B_pad // tile,)

    flops = 2 * B_pad * sum(r * LANES for r in layout["w_rows"])
    bytes_accessed = (2 * slab.size + 4 * x.size + 4 * B_pad * LANES)

    out = pl.pallas_call(
        _make_actor_kernel(layout, act_limit),
        out_shape=jax.ShapeDtypeStruct((B_pad, LANES), jnp.float32),
        grid_spec=pltpu.PrefetchScalarGridSpec(
            num_scalar_prefetch=0,
            grid=grid,
            in_specs=[
                # Row-tiled activations.
                pl.BlockSpec((tile, ctx_pad), lambda i: (i, 0)),
                # Constant block: the 80 KiB parameter slab is DMA'd once and
                # stays VMEM-resident across all grid steps.
                pl.BlockSpec((layout["rows"], LANES), lambda i: (0, 0)),
            ],
            out_specs=pl.BlockSpec((tile, LANES), lambda i: (i, 0)),
        ),
        compiler_params=pltpu.CompilerParams(
            dimension_semantics=("parallel",)),    # shards row-blocks across v7x TCs
        cost_estimate=pl.CostEstimate(flops=flops,
                                      transcendentals=2 * B_pad * LANES,
                                      bytes_accessed=bytes_accessed),
    )(x, slab)

    out = out[:B, :act_dim]                        # drop batch + lane padding
    # torch `.squeeze(0)`: drops the batch dim only when B == 1.
    return jnp.squeeze(out, 0) if B == 1 else out
    # TODO(synk): the unbatched (0-D / 1-D obs entries) branch of forward() is
    # host-side dict plumbing in the original module and is not implemented here.


# ------------------------------ pure-JAX ref -------------------------------
def reference_forward(obs, params, layout, act_limit):
    parts = [jnp.asarray(obs[k], jnp.float32) for k in layout["part_keys"]]
    x = jnp.concatenate(parts, axis=1)
    hp = jax.lax.Precision.HIGHEST
    h = x
    for j, (w, b) in enumerate(params):
        h = jnp.dot(h, w.astype(jnp.float32), precision=hp) + b.astype(jnp.float32)
        if j < len(params) - 1:
            h = jnp.maximum(h, 0.0)                      # ReLU hidden activation
    out = act_limit * (1.0 / (1.0 + jnp.exp(-h)))        # Sigmoid output activation
    return jnp.squeeze(out, 0) if out.shape[0] == 1 else out


# ---------------------------------- main -----------------------------------
if __name__ == "__main__":
    B = 2
    obs_spec = (("state", 6), ("goal", 2))         # non-image observation keys, fixed order
    hidden_sizes = (32, 32)
    act_dim = 4
    act_limit = 2.0

    key = jax.random.PRNGKey(0)
    k_img, k_state, k_goal, k_par = jax.random.split(key, 4)
    obs = {
        "image": jax.random.normal(k_img, (B, 4, 16, 16), jnp.float32),  # ignored by MLPActor
        "state": jax.random.normal(k_state, (B, 6), jnp.float32),
        "goal":  jax.random.normal(k_goal, (B, 2), jnp.float32),
    }

    layout = make_layout(obs_spec, hidden_sizes, act_dim)
    params = make_params(k_par, layout["sizes"])   # bf16-stored parameters
    slab = pack_params(params, layout)

    a = jax.block_until_ready(mlp_actor_forward(obs, slab, layout, act_limit))
    a_ref = jax.block_until_ready(reference_forward(obs, params, layout, act_limit))

    assert a.shape == (B, act_dim), a.shape
    # Kernel: bf16 matmul operands with f32 accumulation + approx EUP reciprocal;
    # reference: f32 HIGHEST on the same bf16-stored parameters.  Well inside 1e-2.
    assert np.allclose(np.asarray(a), np.asarray(a_ref), rtol=1e-2, atol=1e-2), (a, a_ref)
    assert np.all(np.asarray(a) >= 0.0) and np.all(np.asarray(a) <= act_limit)

    print("KERNEL_OK")
</pallas_src>

<mosaic_0001>
module attributes {stable_mosaic.version = 11 : i64} {
  func.func @kernel(%arg0: i32, %arg1: memref<8x16xf32, #tpu.memory_space<vmem>>, %arg2: memref<320x128xbf16, #tpu.memory_space<vmem>>, %arg3: memref<8x128xf32, #tpu.memory_space<vmem>>) attributes {dimension_semantics = [#tpu.dimension_semantics<parallel>], iteration_bounds = array<i64: 1>, scalar_prefetch = 0 : i64, scratch_operands = 0 : i64, tpu.core_type = #tpu.core_type<tc>, window_params = [{transform_indices = @transform_0, window_bounds = array<i64: 8, 16>}, {pipeline_mode = #tpu.pipeline_mode<synchronous>, transform_indices = @transform_1, window_bounds = array<i64: 320, 128>}, {transform_indices = @transform_2, window_bounds = array<i64: 8, 128>}]} {
    %c0 = arith.constant 0 : index
    %c0_0 = arith.constant 0 : index
    %0 = vector.load %arg1[%c0, %c0_0] : memref<8x16xf32, #tpu.memory_space<vmem>>, vector<8x16xf32>
    %c0_1 = arith.constant 0 : index
    %c0_2 = arith.constant 0 : index
    %1 = vector.load %arg2[%c0_1, %c0_2] : memref<320x128xbf16, #tpu.memory_space<vmem>>, vector<16x128xbf16>
    %c16 = arith.constant 16 : index
    %c0_3 = arith.constant 0 : index
    %2 = vector.load %arg2[%c16, %c0_3] : memref<320x128xbf16, #tpu.memory_space<vmem>>, vector<1x128xbf16>
    %3 = arith.extf %2 : vector<1x128xbf16> to vector<1x128xf32>
    %4 = arith.truncf %0 : vector<8x16xf32> to vector<8x16xbf16>
    %cst = arith.constant dense<0.000000e+00> : vector<8x128xf32>
    %5 = tpu.matmul %4, %1, %cst {dimension_numbers = #tpu.dot_dimension_numbers<[1], [0], [0], [1], [0, 0, 1, 1], [], []>} : vector<8x16xbf16>, vector<16x128xbf16>, vector<8x128xf32> -> vector<8x128xf32>
    %6 = vector.broadcast %3 : vector<1x128xf32> to vector<8x128xf32>
    %7 = arith.addf %5, %6 : vector<8x128xf32>
    %cst_4 = arith.constant 0.000000e+00 : f32
    %8 = vector.broadcast %cst_4 : f32 to vector<8x128xf32>
    %9 = arith.maximumf %7, %8 : vector<8x128xf32>
    %c32 = arith.constant 32 : index
    %c0_5 = arith.constant 0 : index
    %10 = vector.load %arg2[%c32, %c0_5] : memref<320x128xbf16, #tpu.memory_space<vmem>>, vector<128x128xbf16>
    %c160 = arith.constant 160 : index
    %c0_6 = arith.constant 0 : index
    %11 = vector.load %arg2[%c160, %c0_6] : memref<320x128xbf16, #tpu.memory_space<vmem>>, vector<1x128xbf16>
    %12 = arith.extf %11 : vector<1x128xbf16> to vector<1x128xf32>
    %13 = arith.truncf %9 : vector<8x128xf32> to vector<8x128xbf16>
    %cst_7 = arith.constant dense<0.000000e+00> : vector<8x128xf32>
    %14 = tpu.matmul %13, %10, %cst_7 {dimension_numbers = #tpu.dot_dimension_numbers<[1], [0], [0], [1], [0, 0, 1, 1], [], []>} : vector<8x128xbf16>, vector<128x128xbf16>, vector<8x128xf32> -> vector<8x128xf32>
    %15 = vector.broadcast %12 : vector<1x128xf32> to vector<8x128xf32>
    %16 = arith.addf %14, %15 : vector<8x128xf32>
    %cst_8 = arith.constant 0.000000e+00 : f32
    %17 = vector.broadcast %cst_8 : f32 to vector<8x128xf32>
    %18 = arith.maximumf %16, %17 : vector<8x128xf32>
    %c176 = arith.constant 176 : index
    %c0_9 = arith.constant 0 : index
    %19 = vector.load %arg2[%c176, %c0_9] : memref<320x128xbf16, #tpu.memory_space<vmem>>, vector<128x128xbf16>
    %c304 = arith.constant 304 : index
    %c0_10 = arith.constant 0 : index
    %20 = vector.load %arg2[%c304, %c0_10] : memref<320x128xbf16, #tpu.memory_space<vmem>>, vector<1x128xbf16>
    %21 = arith.extf %20 : vector<1x128xbf16> to vector<1x128xf32>
    %22 = arith.truncf %18 : vector<8x128xf32> to vector<8x128xbf16>
    %cst_11 = arith.constant dense<0.000000e+00> : vector<8x128xf32>
    %23 = tpu.matmul %22, %19, %cst_11 {dimension_numbers = #tpu.dot_dimension_numbers<[1], [0], [0], [1], [0, 0, 1, 1], [], []>} : vector<8x128xbf16>, vector<128x128xbf16>, vector<8x128xf32> -> vector<8x128xf32>
    %24 = vector.broadcast %21 : vector<1x128xf32> to vector<8x128xf32>
    %25 = arith.addf %23, %24 : vector<8x128xf32>
    %cst_12 = arith.constant 0.000000e+00 : f32
    %26 = vector.broadcast %cst_12 : f32 to vector<8x128xf32>
    %27 = arith.subf %26, %25 : vector<8x128xf32>
    %28 = math.exp %27 : vector<8x128xf32>
    %cst_13 = arith.constant 1.000000e+00 : f32
    %29 = vector.broadcast %cst_13 : f32 to vector<8x128xf32>
    %30 = arith.addf %29, %28 : vector<8x128xf32>
    %31 = tpu.reciprocal %30 {approx = true} : vector<8x128xf32> -> vector<8x128xf32>
    %cst_14 = arith.constant 2.000000e+00 : f32
    %32 = vector.broadcast %cst_14 : f32 to vector<8x128xf32>
    %33 = arith.mulf %32, %31 : vector<8x128xf32>
    %c0_15 = arith.constant 0 : index
    %c0_16 = arith.constant 0 : index
    %34 = vector.load %arg3[%c0_15, %c0_16] : memref<8x128xf32, #tpu.memory_space<vmem>>, vector<8x128xf32>
    tpu.vector_store %arg3[%c0_15, %c0_16], %33 {strides = array<i32>} : memref<8x128xf32, #tpu.memory_space<vmem>>, vector<8x128xf32>,
    return
  }
  func.func @transform_0(%arg0: i32) -> (i32, i32) {
    %c0_i32 = arith.constant 0 : i32
    %c0_i32_0 = arith.constant 0 : i32
    return %arg0, %c0_i32 : i32, i32
  }
  func.func @transform_1(%arg0: i32) -> (i32, i32) {
    %c0_i32 = arith.constant 0 : i32
    %c0_i32_0 = arith.constant 0 : i32
    %c0_i32_1 = arith.constant 0 : i32
    return %c0_i32, %c0_i32_0 : i32, i32
  }
  func.func @transform_2(%arg0: i32) -> (i32, i32) {
    %c0_i32 = arith.constant 0 : i32
    %c0_i32_0 = arith.constant 0 : i32
    return %arg0, %c0_i32 : i32, i32
  }
}

</mosaic_0001>

<llo_original>
// kernel: tpu_custom_call.1
$region0: #{tpu_custom_call.1}
  #allocation0 [shape = 'u32[]', space=smem, size = 0x4, offset = 0x4, fixed_abs, tag = 'smem constant byte address 0x4 - core index']
  #allocation1 [shape = 'u32[72,128]{1,0:T(1,128)}', space=vmem, size = 0x9000, scoped, tag = 'internal scratch']
  %s0 = inlined_call_operand.hbm [shape: f32[8,16], index: 0, kind: input, shape index: {}]
  %s1 = inlined_call_operand.hbm [shape: bf16[320,128], index: 1, kind: input, shape index: {}]
  %s2 = inlined_call_operand.hbm [shape: f32[8,128], index: 2, kind: output, shape index: {}]
  %s3 = sld [smem:[#allocation0]]
  $region26: #{tpu_custom_call.1} parent=0
    _
  %s5 = ssub.s32 1, %s3
  %s6 = scalar_select 0, %s5, %s3
  $region1: #{tpu_custom_call.1} parent=0
    #allocation2 [shape = 'u8[4096]{0}', space=vmem, size = 0x1000, scoped, tag = 'input window, operand 0, single buffered']
    #allocation3 [shape = 's32[1]{0}', space=sflag, size = 0x4, scoped, tag = 'scoped memory for tpu_custom_call.1']
    #allocation4 [shape = 's32[1]{0}', space=sflag, size = 0x4, scoped, tag = 'scoped memory for tpu_custom_call.1']
    #allocation5 [shape = 'u8[81920]{0}', space=vmem, size = 0x14000, scoped, tag = 'input window, operand 1, single buffered']
    #allocation6 [shape = 's32[1]{0}', space=sflag, size = 0x4, scoped, tag = 'scoped memory for tpu_custom_call.1']
    #allocation7 [shape = 'u8[4096]{0}', space=vmem, size = 0x1000, scoped, tag = 'output window, operand 0, single buffered']
    %7 = vsyncpa [#allocation3], 0
    %8 = vsyncpa [#allocation6], 0
    %9 = vsyncpa [#allocation4], 0
    // Predicated region
    $region2: #{tpu_custom_call.1} parent=1 // pred_check
      _
    $region3: #{tpu_custom_call.1} parent=1 // pred_check_branch
      %11 = sbr.rel (0) target = $region5
    $region4: #{tpu_custom_call.1} parent=1 // pred_region
      %13 = vsyncadd [#allocation3], 0
      %s15 = sshll.u32 %s0, 4
      %s16 = int_to_ptr.hbm [resolvable:$true] %s15
      %s17 = sshll.u32 [#allocation2], 4
      %s18 = int_to_ptr.vmem [resolvable:$true] %s17
      %20 = dma.hbm_to_vmem [thread:$0]  %s16, 128, %s18, [#allocation3]
    $region5: #{tpu_custom_call.1} parent=1 // pred_fallthru
      _
    // Predicated region
    $region6: #{tpu_custom_call.1} parent=1 // pred_check
      _
    $region7: #{tpu_custom_call.1} parent=1 // pred_check_branch
      %22 = sbr.rel (0) target = $region9
    $region8: #{tpu_custom_call.1} parent=1 // pred_region
      %24 = vsyncadd [#allocation6], 0
      %s25 = sshll.u32 %s1, 4
      %s26 = int_to_ptr.hbm [resolvable:$true] %s25
      %s27 = sshll.u32 [#allocation5], 4
      %s28 = int_to_ptr.vmem [resolvable:$true] %s27
      %33 = dma.hbm_to_vmem [thread:$0]  %s26, 2560, %s28, [#allocation6], 64, 64, 4
    $region9: #{tpu_custom_call.1} parent=1 // pred_fallthru
      _
    // Predicated region
    $region10: #{tpu_custom_call.1} parent=1 // pred_check
      _
    $region11: #{tpu_custom_call.1} parent=1 // pred_check_branch
      %35 = sbr.rel (0) target = $region13
    $region12: #{tpu_custom_call.1} parent=1 // pred_region
      %37 = dma.done [#allocation3], 128
    $region13: #{tpu_custom_call.1} parent=1 // pred_fallthru
      _
    // Predicated region
    $region14: #{tpu_custom_call.1} parent=1 // pred_check
      _
    $region15: #{tpu_custom_call.1} parent=1 // pred_check_branch
      %39 = sbr.rel (0) target = $region17
    $region16: #{tpu_custom_call.1} parent=1 // pred_region
      %41 = dma.done [#allocation6], 2560
    $region17: #{tpu_custom_call.1} parent=1 // pred_fallthru
      _
    %v43 = vld [vmem:[#allocation2] sm:$0xff]
    %v44 = vld [vmem:[#allocation5] sm:$0xf]
    %v45 = vld [vmem:[#allocation5 + $0x4] sm:$0xf]
    %v46 = vld [vmem:[#allocation5 + $0x8] sm:$0x1]
    %v47 = vunpack.c.l.bf16 %v46
    %v48 = vpack.c.bf16 %v43, %v43
    %v49 = vperm.slane %v47, 0
    %v52 = vunpack.c.l.b16 %v44
    %v53 = vunpack.c.l.b16 %v45
    %v54 = vpack.c.b16 %v53, %v52
    %vm56 = vcmask 130048
    %v58 = vsel %vm56, %v48, 0
    %60 = vmatpush.bf16.msra.mxu0 0
    %61 = vmatpush.bf16.msra.mxu0 0
    %62 = vmatpush.bf16.msra.mxu0 0
    %63 = vmatpush.bf16.msra.mxu0 0
    %64 = vmatpush.bf16.msra.mxu0 0
    %65 = vmatpush.bf16.msra.mxu0 0
    %66 = vmatpush.bf16.msra.mxu0 0
    %67 = vmatpush.bf16.msra.mxu0 %v54
    %68 = vmatmul.bf16.gmra.mxu0 %v58
    %v69 = vpop.f32.mrf.mxu0
    %v70 = vadd.f32 %v49, %v69
    %v71 = vpop.f32.mrf.mxu0
    %72 = vdwg.mxu0
    %v73 = vmax.f32 %v70, 0.0
    %v74 = vld [vmem:[#allocation5 + $0x10] sm:$0xf]
    %v75 = vld [vmem:[#allocation5 + $0x14] sm:$0xf]
    %v76 = vld [vmem:[#allocation5 + $0x18] sm:$0xf]
    %v77 = vld [vmem:[#allocation5 + $0x1c] sm:$0xf]
    %v78 = vld [vmem:[#allocation5 + $0x20] sm:$0xf]
    %v79 = vld [vmem:[#allocation5 + $0x24] sm:$0xf]
    %v80 = vld [vmem:[#allocation5 + $0x28] sm:$0xf]
    %v81 = vld [vmem:[#allocation5 + $0x2c] sm:$0xf]
    %v82 = vld [vmem:[#allocation5 + $0x30] sm:$0xf]
    %v83 = vld [vmem:[#allocation5 + $0x34] sm:$0xf]
    %v84 = vld [vmem:[#allocation5 + $0x38] sm:$0xf]
    %v85 = vld [vmem:[#allocation5 + $0x3c] sm:$0xf]
    %v86 = vld [vmem:[#allocation5 + $0x40] sm:$0xf]
    %v87 = vld [vmem:[#allocation5 + $0x44] sm:$0xf]
    %v88 = vld [vmem:[#allocation5 + $0x48] sm:$0xf]
    %v89 = vld [vmem:[#allocation5 + $0x4c] sm:$0xf]
    %v90 = vld [vmem:[#allocation5 + $0x50] sm:$0x1]
    %v91 = vunpack.c.l.bf16 %v90
    %v92 = vpack.c.bf16 %v73, %v73
    %v93 = vperm.slane %v91, 0
    %v110 = vunpack.c.l.b16 %v74
    %v111 = vunpack.c.l.b16 %v75
    %v112 = vunpack.c.l.b16 %v76
    %v113 = vunpack.c.l.b16 %v77
    %v114 = vunpack.c.l.b16 %v78
    %v115 = vunpack.c.l.b16 %v79
    %v116 = vunpack.c.l.b16 %v80
    %v117 = vunpack.c.l.b16 %v81
    %v118 = vunpack.c.l.b16 %v82
    %v119 = vunpack.c.l.b16 %v83
    %v120 = vunpack.c.l.b16 %v84
    %v121 = vunpack.c.l.b16 %v85
    %v122 = vunpack.c.l.b16 %v86
    %v123 = vunpack.c.l.b16 %v87
    %v124 = vunpack.c.l.b16 %v88
    %v125 = vunpack.c.l.b16 %v89
    %v126 = vpack.c.b16 %v111, %v110
    %v127 = vpack.c.b16 %v113, %v112
    %v128 = vpack.c.b16 %v115, %v114
    %v129 = vpack.c.b16 %v117, %v116
    %v130 = vpack.c.b16 %v119, %v118
    %v131 = vpack.c.b16 %v121, %v120
    %v132 = vpack.c.b16 %v123, %v122
    %v133 = vpack.c.b16 %v125, %v124
    %142 = vmatpush.bf16.msra.mxu0 %v133
    %143 = vmatpush.bf16.msra.mxu0 %v132
    %144 = vmatpush.bf16.msra.mxu0 %v131
    %145 = vmatpush.bf16.msra.mxu0 %v130
    %146 = vmatpush.bf16.msra.mxu0 %v129
    %147 = vmatpush.bf16.msra.mxu0 %v128
    %148 = vmatpush.bf16.msra.mxu0 %v127
    %149 = vmatpush.bf16.msra.mxu0 %v126
    %150 = vmatmul.bf16.gmra.mxu0 %v92
    %v151 = vpop.f32.mrf.mxu0
    %v152 = vadd.f32 %v93, %v151
    %v153 = vpop.f32.mrf.mxu0
    %154 = vdwg.mxu0
    %v155 = vmax.f32 %v152, 0.0
    %v156 = vld [vmem:[#allocation5 + $0x58] sm:$0xf]
    %v157 = vld [vmem:[#allocation5 + $0x5c] sm:$0xf]
    %v158 = vld [vmem:[#allocation5 + $0x60] sm:$0xf]
    %v159 = vld [vmem:[#allocation5 + $0x64] sm:$0xf]
    %v160 = vld [vmem:[#allocation5 + $0x68] sm:$0xf]
    %v161 = vld [vmem:[#allocation5 + $0x6c] sm:$0xf]
    %v162 = vld [vmem:[#allocation5 + $0x70] sm:$0xf]
    %v163 = vld [vmem:[#allocation5 + $0x74] sm:$0xf]
    %v164 = vld [vmem:[#allocation5 + $0x78] sm:$0xf]
    %v165 = vld [vmem:[#allocation5 + $0x7c] sm:$0xf]
    %v166 = vld [vmem:[#allocation5 + $0x80] sm:$0xf]
    %v167 = vld [vmem:[#allocation5 + $0x84] sm:$0xf]
    %v168 = vld [vmem:[#allocation5 + $0x88] sm:$0xf]
    %v169 = vld [vmem:[#allocation5 + $0x8c] sm:$0xf]
    %v170 = vld [vmem:[#allocation5 + $0x90] sm:$0xf]
    %v171 = vld [vmem:[#allocation5 + $0x94] sm:$0xf]
    %v172 = vld [vmem:[#allocation5 + $0x98] sm:$0x1]
    %v173 = vunpack.c.l.bf16 %v172
    %v174 = vpack.c.bf16 %v155, %v155
    %v175 = vperm.slane %v173, 0
    %v192 = vunpack.c.l.b16 %v156
    %v193 = vunpack.c.l.b16 %v157
    %v194 = vunpack.c.l.b16 %v158
    %v195 = vunpack.c.l.b16 %v159
    %v196 = vunpack.c.l.b16 %v160
    %v197 = vunpack.c.l.b16 %v161
    %v198 = vunpack.c.l.b16 %v162
    %v199 = vunpack.c.l.b16 %v163
    %v200 = vunpack.c.l.b16 %v164
    %v201 = vunpack.c.l.b16 %v165
    %v202 = vunpack.c.l.b16 %v166
    %v203 = vunpack.c.l.b16 %v167
    %v204 = vunpack.c.l.b16 %v168
    %v205 = vunpack.c.l.b16 %v169
    %v206 = vunpack.c.l.b16 %v170
    %v207 = vunpack.c.l.b16 %v171
    %v208 = vpack.c.b16 %v193, %v192
    %v209 = vpack.c.b16 %v195, %v194
    %v210 = vpack.c.b16 %v197, %v196
    %v211 = vpack.c.b16 %v199, %v198
    %v212 = vpack.c.b16 %v201, %v200
    %v213 = vpack.c.b16 %v203, %v202
    %v214 = vpack.c.b16 %v205, %v204
    %v215 = vpack.c.b16 %v207, %v206
    %224 = vmatpush.bf16.msra.mxu0 %v215
    %225 = vmatpush.bf16.msra.mxu0 %v214
    %226 = vmatpush.bf16.msra.mxu0 %v213
    %227 = vmatpush.bf16.msra.mxu0 %v212
    %228 = vmatpush.bf16.msra.mxu0 %v211
    %229 = vmatpush.bf16.msra.mxu0 %v210
    %230 = vmatpush.bf16.msra.mxu0 %v209
    %231 = vmatpush.bf16.msra.mxu0 %v208
    %232 = vmatmul.bf16.gmra.mxu0 %v174
    %v233 = vpop.f32.mrf.mxu0
    %v234 = vadd.f32 %v175, %v233
    %v235 = vpop.f32.mrf.mxu0
    %236 = vdwg.mxu0
    %v237 = vsub.f32 0.0, %v234
    %v238 = vmul.f32 %v237, 1.442695
    %v239 = vpow.pop %v238
    %v240 = vadd.f32 %v239, 1.0
    %v241 = vrcp.pop %v240
    %v242 = vmul.f32 %v241, 2.0
    %243 = vst [vmem:[#allocation7] sm:$0xff] %v242
    // Predicated region
    $region18: #{tpu_custom_call.1} parent=1 // pred_check
      _
    $region19: #{tpu_custom_call.1} parent=1 // pred_check_branch
      %245 = sbr.rel (0) target = $region21
    $region20: #{tpu_custom_call.1} parent=1 // pred_region
      %247 = vsyncadd [#allocation4], 0
      %s249 = sshll.u32 [#allocation7], 4
      %s250 = int_to_ptr.vmem [resolvable:$true] %s249
      %s251 = sshll.u32 %s2, 4
      %s252 = int_to_ptr.hbm [resolvable:$true] %s251
      %254 = dma.vmem_to_hbm [thread:$0]  %s250, 128, %s252, [#allocation4]
    $region21: #{tpu_custom_call.1} parent=1 // pred_fallthru
      _
    // Predicated region
    $region22: #{tpu_custom_call.1} parent=1 // pred_check
      _
    $region23: #{tpu_custom_call.1} parent=1 // pred_check_branch
      %256 = sbr.rel (0) target = $region25
    $region24: #{tpu_custom_call.1} parent=1 // pred_region
      %258 = dma.done [#allocation4], 128
    $region25: #{tpu_custom_call.1} parent=1 // pred_fallthru
      _
    %259 = vsyncpa [#allocation3], 1
    %260 = vsyncpa [#allocation6], 1
    %261 = vsyncpa [#allocation4], 1

</llo_original>
